<compile_context>
chip_gen: v7x
topology: tpu7x:2x2x1
jax: 0.10.0
libtpu: 0.0.40
codegen_flags: <defaults>
</compile_context>

<pallas_src>
import functools

import jax
import jax.numpy as jnp
from jax import lax
from jax.experimental import pallas as pl
from jax.experimental.pallas import tpu as pltpu


def _sepconv_kernel(x_ref, dwt_ref, pwt_ref, bias_ref, o_ref, *, C, Cout, H, W):
    """One batch element per grid step.

    x_ref    : (1, C, HW)     input image, pixels flattened onto lanes
    dwt_ref  : (9, C, HW)     per-tap depthwise weights, pre-broadcast over
                              lanes with the zero-padding mask folded in
    pwt_ref  : (C, Cout, HW)  BN-scale-folded pointwise weights, pre-broadcast
    bias_ref : (Cout, HW)     fully folded bias (dw bias + pw bias + BN shift)
    o_ref    : (1, Cout, HW)
    """
    HW = H * W
    x = x_ref[0]                                   # (C, HW) f32, ~1 vreg worth

    # ---- depthwise 3x3, stride 1, pad 1: 9 rolled full-slab FMAs ------------
    # roll(x, -(dh*W + dw)) aligns the (h+dh, w+dw) source pixel onto (h, w);
    # out-of-image taps are zeroed by the mask folded into dwt.  Rolls ride the
    # XLU slot, so the shift work overlaps the VPU multiplies/adds.
    acc = x * dwt_ref[4]                           # centre tap (dh = dw = 0)
    for t in range(9):
        if t == 4:
            continue
        dh, dw = t // 3 - 1, t % 3 - 1
        s = dh * W + dw
        acc = acc + pltpu.roll(x, shift=(-s) % HW, axis=1) * dwt_ref[t]

    # ---- pointwise 1x1 (+ folded BatchNorm) + SiLU, one (Cout, HW) slab ------
    y = bias_ref[...]                              # (Cout, HW)
    for c in range(C):
        # (1, HW) depthwise row, sublane-broadcast against the (Cout, HW) weights.
        y = y + acc[c:c + 1, :] * pwt_ref[c]
    y = y * pl.reciprocal(1.0 + jnp.exp(-y))       # exact SiLU: y * sigmoid(y)
    o_ref[0] = y                                   # single dense lane-wide store


def separable_conv_block(x_nchw, dw_w, dw_b, pw_w, pw_b,
                         bn_gamma, bn_beta, bn_mean, bn_var, eps=1e-4):
    """Drop-in for SeparableConvBlock.forward (eval-mode BN). x_nchw: (N,C,H,W).

    eps=1e-4 matches the module's nn.BatchNorm2d(eps=0.0001).
    """
    N, C, H, W = x_nchw.shape
    Cout = pw_w.shape[0]
    HW = H * W

    # Lane-dense view of the input: (N, C, H*W).  Pure metadata reshape.
    x = x_nchw.reshape(N, C, HW).astype(jnp.float32)

    # ---- one-time constant folding (plain JAX glue, O(C*Cout*H*W) tiny) ------
    dw_flat = dw_w[:, 0, :, :].reshape(C, 9).astype(jnp.float32)        # (C, 9)
    pw_mat = pw_w[:, :, 0, 0].astype(jnp.float32)                       # (Cout, C)
    inv_std = 1.0 / jnp.sqrt(bn_var.astype(jnp.float32) + eps)
    scale = bn_gamma.astype(jnp.float32) * inv_std                      # (Cout,)
    pw_fused = pw_mat * scale[:, None]                                  # BN scale folded
    bias_fused = (scale * (pw_mat @ dw_b.astype(jnp.float32)
                           + pw_b.astype(jnp.float32))
                  + bn_beta.astype(jnp.float32)
                  - scale * bn_mean.astype(jnp.float32))                # (Cout,)
    # TODO(synk): training-mode BatchNorm (batch statistics + running-stat
    # update with momentum=0.997) is not implemented; inference-mode BN only.

    # Per-tap validity mask (zero padding) folded into the depthwise weights,
    # then everything pre-broadcast to lane-dense slabs so the kernel does only
    # full-slab elementwise ops.
    hh = jnp.arange(H)
    ww = jnp.arange(W)
    valid = []
    for t in range(9):
        dh, dw = t // 3 - 1, t % 3 - 1
        vh = (hh + dh >= 0) & (hh + dh <= H - 1)                        # (H,)
        vw = (ww + dw >= 0) & (ww + dw <= W - 1)                        # (W,)
        valid.append((vh[:, None] & vw[None, :]).reshape(HW))
    valid = jnp.stack(valid).astype(jnp.float32)                        # (9, HW)

    dwt = dw_flat.T[:, :, None] * valid[:, None, :]                     # (9, C, HW)
    pwt = jnp.broadcast_to(pw_fused.T[:, :, None], (C, Cout, HW))       # (C, Cout, HW)
    bias_full = jnp.broadcast_to(bias_fused[:, None], (Cout, HW))       # (Cout, HW)
    dwt = jnp.asarray(dwt, jnp.float32)
    pwt = jnp.asarray(pwt, jnp.float32)
    bias_full = jnp.asarray(bias_full, jnp.float32)

    kernel = functools.partial(_sepconv_kernel, C=C, Cout=Cout, H=H, W=W)
    out = pl.pallas_call(
        kernel,
        out_shape=jax.ShapeDtypeStruct((N, Cout, HW), jnp.float32),
        grid=(N,),
        in_specs=[
            pl.BlockSpec((1, C, HW), lambda n: (n, 0, 0)),
            pl.BlockSpec((9, C, HW), lambda n: (0, 0, 0)),
            pl.BlockSpec((C, Cout, HW), lambda n: (0, 0, 0)),
            pl.BlockSpec((Cout, HW), lambda n: (0, 0)),
        ],
        out_specs=pl.BlockSpec((1, Cout, HW), lambda n: (n, 0, 0)),
        compiler_params=pltpu.CompilerParams(
            dimension_semantics=("parallel",)),
    )(x, dwt, pwt, bias_full)

    return out.reshape(N, Cout, H, W)              # back to NCHW (free reshape)


def _reference(x, dw_w, dw_b, pw_w, pw_b, gamma, beta, mean, var, eps=1e-4):
    """Pure-JAX reference (NCHW, matches PyTorch semantics, eval-mode BN)."""
    y = lax.conv_general_dilated(
        x, dw_w, window_strides=(1, 1), padding=((1, 1), (1, 1)),
        feature_group_count=x.shape[1],
        dimension_numbers=("NCHW", "OIHW", "NCHW"),
        precision=lax.Precision.HIGHEST)
    y = y + dw_b[None, :, None, None]
    y = lax.conv_general_dilated(
        y, pw_w, window_strides=(1, 1), padding=((0, 0), (0, 0)),
        dimension_numbers=("NCHW", "OIHW", "NCHW"),
        precision=lax.Precision.HIGHEST)
    y = y + pw_b[None, :, None, None]
    y = ((y - mean[None, :, None, None])
         / jnp.sqrt(var[None, :, None, None] + eps)
         * gamma[None, :, None, None] + beta[None, :, None, None])
    return y * jax.nn.sigmoid(y)


if __name__ == "__main__":
    N, C, Cout, H, W = 2, 4, 8, 16, 16
    key = jax.random.PRNGKey(0)
    ks = jax.random.split(key, 9)

    x = jax.random.normal(ks[0], (N, C, H, W), jnp.float32)
    # Parameter shapes exactly as nn.Conv2d / nn.BatchNorm2d would create them.
    dw_w = 0.2 * jax.random.normal(ks[1], (C, 1, 3, 3), jnp.float32)      # depthwise
    dw_b = 0.1 * jax.random.normal(ks[2], (C,), jnp.float32)
    pw_w = 0.2 * jax.random.normal(ks[3], (Cout, C, 1, 1), jnp.float32)   # pointwise
    pw_b = 0.1 * jax.random.normal(ks[4], (Cout,), jnp.float32)
    bn_gamma = 1.0 + 0.1 * jax.random.normal(ks[5], (Cout,), jnp.float32)
    bn_beta = 0.1 * jax.random.normal(ks[6], (Cout,), jnp.float32)
    bn_mean = 0.1 * jax.random.normal(ks[7], (Cout,), jnp.float32)
    bn_var = jnp.abs(1.0 + 0.1 * jax.random.normal(ks[8], (Cout,), jnp.float32))

    out = jax.block_until_ready(
        separable_conv_block(x, dw_w, dw_b, pw_w, pw_b,
                             bn_gamma, bn_beta, bn_mean, bn_var))

    ref = _reference(x, dw_w, dw_b, pw_w, pw_b,
                     bn_gamma, bn_beta, bn_mean, bn_var)
    assert out.shape == (N, Cout, H, W), out.shape
    max_err = float(jnp.max(jnp.abs(out - ref)))
    assert jnp.allclose(out, ref, atol=1e-3, rtol=1e-3), max_err

    print("KERNEL_OK")
</pallas_src>

<mosaic_0001>
module attributes {stable_mosaic.version = 11 : i64} {
  func.func @_sepconv_kernel(%arg0: i32, %arg1: memref<1x4x256xf32, #tpu.memory_space<vmem>>, %arg2: memref<9x4x256xf32, #tpu.memory_space<vmem>>, %arg3: memref<4x8x256xf32, #tpu.memory_space<vmem>>, %arg4: memref<8x256xf32, #tpu.memory_space<vmem>>, %arg5: memref<1x8x256xf32, #tpu.memory_space<vmem>>) attributes {dimension_semantics = [#tpu.dimension_semantics<parallel>], iteration_bounds = array<i64: 2>, scalar_prefetch = 0 : i64, scratch_operands = 0 : i64, tpu.core_type = #tpu.core_type<tc>, window_params = [{transform_indices = @transform_0, window_bounds = array<i64: 1, 4, 256>}, {pipeline_mode = #tpu.pipeline_mode<synchronous>, transform_indices = @transform_1, window_bounds = array<i64: 9, 4, 256>}, {pipeline_mode = #tpu.pipeline_mode<synchronous>, transform_indices = @transform_2, window_bounds = array<i64: 4, 8, 256>}, {pipeline_mode = #tpu.pipeline_mode<synchronous>, transform_indices = @transform_3, window_bounds = array<i64: 8, 256>}, {transform_indices = @transform_4, window_bounds = array<i64: 1, 8, 256>}]} {
    %c0 = arith.constant 0 : index
    %c0_0 = arith.constant 0 : index
    %c0_1 = arith.constant 0 : index
    %0 = vector.load %arg1[%c0, %c0_0, %c0_1] : memref<1x4x256xf32, #tpu.memory_space<vmem>>, vector<1x4x256xf32>
    %1 = vector.shape_cast %0 : vector<1x4x256xf32> to vector<4x256xf32>
    %c4 = arith.constant 4 : index
    %c0_2 = arith.constant 0 : index
    %c0_3 = arith.constant 0 : index
    %2 = vector.load %arg2[%c4, %c0_2, %c0_3] : memref<9x4x256xf32, #tpu.memory_space<vmem>>, vector<1x4x256xf32>
    %3 = vector.shape_cast %2 : vector<1x4x256xf32> to vector<4x256xf32>
    %4 = arith.mulf %1, %3 : vector<4x256xf32>
    %c17_i32 = arith.constant 17 : i32
    %5 = tpu.dynamic_rotate %1 by %c17_i32 dim 1 : vector<4x256xf32>, i32 -> vector<4x256xf32>
    %c0_4 = arith.constant 0 : index
    %c0_5 = arith.constant 0 : index
    %c0_6 = arith.constant 0 : index
    %6 = vector.load %arg2[%c0_4, %c0_5, %c0_6] : memref<9x4x256xf32, #tpu.memory_space<vmem>>, vector<1x4x256xf32>
    %7 = vector.shape_cast %6 : vector<1x4x256xf32> to vector<4x256xf32>
    %8 = arith.mulf %5, %7 : vector<4x256xf32>
    %9 = arith.addf %4, %8 : vector<4x256xf32>
    %c16_i32 = arith.constant 16 : i32
    %10 = tpu.dynamic_rotate %1 by %c16_i32 dim 1 : vector<4x256xf32>, i32 -> vector<4x256xf32>
    %c1 = arith.constant 1 : index
    %c0_7 = arith.constant 0 : index
    %c0_8 = arith.constant 0 : index
    %11 = vector.load %arg2[%c1, %c0_7, %c0_8] : memref<9x4x256xf32, #tpu.memory_space<vmem>>, vector<1x4x256xf32>
    %12 = vector.shape_cast %11 : vector<1x4x256xf32> to vector<4x256xf32>
    %13 = arith.mulf %10, %12 : vector<4x256xf32>
    %14 = arith.addf %9, %13 : vector<4x256xf32>
    %c15_i32 = arith.constant 15 : i32
    %15 = tpu.dynamic_rotate %1 by %c15_i32 dim 1 : vector<4x256xf32>, i32 -> vector<4x256xf32>
    %c2 = arith.constant 2 : index
    %c0_9 = arith.constant 0 : index
    %c0_10 = arith.constant 0 : index
    %16 = vector.load %arg2[%c2, %c0_9, %c0_10] : memref<9x4x256xf32, #tpu.memory_space<vmem>>, vector<1x4x256xf32>
    %17 = vector.shape_cast %16 : vector<1x4x256xf32> to vector<4x256xf32>
    %18 = arith.mulf %15, %17 : vector<4x256xf32>
    %19 = arith.addf %14, %18 : vector<4x256xf32>
    %c1_i32 = arith.constant 1 : i32
    %20 = tpu.dynamic_rotate %1 by %c1_i32 dim 1 : vector<4x256xf32>, i32 -> vector<4x256xf32>
    %c3 = arith.constant 3 : index
    %c0_11 = arith.constant 0 : index
    %c0_12 = arith.constant 0 : index
    %21 = vector.load %arg2[%c3, %c0_11, %c0_12] : memref<9x4x256xf32, #tpu.memory_space<vmem>>, vector<1x4x256xf32>
    %22 = vector.shape_cast %21 : vector<1x4x256xf32> to vector<4x256xf32>
    %23 = arith.mulf %20, %22 : vector<4x256xf32>
    %24 = arith.addf %19, %23 : vector<4x256xf32>
    %c255_i32 = arith.constant 255 : i32
    %25 = tpu.dynamic_rotate %1 by %c255_i32 dim 1 : vector<4x256xf32>, i32 -> vector<4x256xf32>
    %c5 = arith.constant 5 : index
    %c0_13 = arith.constant 0 : index
    %c0_14 = arith.constant 0 : index
    %26 = vector.load %arg2[%c5, %c0_13, %c0_14] : memref<9x4x256xf32, #tpu.memory_space<vmem>>, vector<1x4x256xf32>
    %27 = vector.shape_cast %26 : vector<1x4x256xf32> to vector<4x256xf32>
    %28 = arith.mulf %25, %27 : vector<4x256xf32>
    %29 = arith.addf %24, %28 : vector<4x256xf32>
    %c241_i32 = arith.constant 241 : i32
    %30 = tpu.dynamic_rotate %1 by %c241_i32 dim 1 : vector<4x256xf32>, i32 -> vector<4x256xf32>
    %c6 = arith.constant 6 : index
    %c0_15 = arith.constant 0 : index
    %c0_16 = arith.constant 0 : index
    %31 = vector.load %arg2[%c6, %c0_15, %c0_16] : memref<9x4x256xf32, #tpu.memory_space<vmem>>, vector<1x4x256xf32>
    %32 = vector.shape_cast %31 : vector<1x4x256xf32> to vector<4x256xf32>
    %33 = arith.mulf %30, %32 : vector<4x256xf32>
    %34 = arith.addf %29, %33 : vector<4x256xf32>
    %c240_i32 = arith.constant 240 : i32
    %35 = tpu.dynamic_rotate %1 by %c240_i32 dim 1 : vector<4x256xf32>, i32 -> vector<4x256xf32>
    %c7 = arith.constant 7 : index
    %c0_17 = arith.constant 0 : index
    %c0_18 = arith.constant 0 : index
    %36 = vector.load %arg2[%c7, %c0_17, %c0_18] : memref<9x4x256xf32, #tpu.memory_space<vmem>>, vector<1x4x256xf32>
    %37 = vector.shape_cast %36 : vector<1x4x256xf32> to vector<4x256xf32>
    %38 = arith.mulf %35, %37 : vector<4x256xf32>
    %39 = arith.addf %34, %38 : vector<4x256xf32>
    %c239_i32 = arith.constant 239 : i32
    %40 = tpu.dynamic_rotate %1 by %c239_i32 dim 1 : vector<4x256xf32>, i32 -> vector<4x256xf32>
    %c8 = arith.constant 8 : index
    %c0_19 = arith.constant 0 : index
    %c0_20 = arith.constant 0 : index
    %41 = vector.load %arg2[%c8, %c0_19, %c0_20] : memref<9x4x256xf32, #tpu.memory_space<vmem>>, vector<1x4x256xf32>
    %42 = vector.shape_cast %41 : vector<1x4x256xf32> to vector<4x256xf32>
    %43 = arith.mulf %40, %42 : vector<4x256xf32>
    %44 = arith.addf %39, %43 : vector<4x256xf32>
    %c0_21 = arith.constant 0 : index
    %c0_22 = arith.constant 0 : index
    %45 = vector.load %arg4[%c0_21, %c0_22] : memref<8x256xf32, #tpu.memory_space<vmem>>, vector<8x256xf32>
    %46 = vector.extract_strided_slice %44 {offsets = [0, 0], sizes = [1, 256], strides = [1, 1]} : vector<4x256xf32> to vector<1x256xf32>
    %c0_23 = arith.constant 0 : index
    %c0_24 = arith.constant 0 : index
    %c0_25 = arith.constant 0 : index
    %47 = vector.load %arg3[%c0_23, %c0_24, %c0_25] : memref<4x8x256xf32, #tpu.memory_space<vmem>>, vector<1x8x256xf32>
    %48 = vector.shape_cast %47 : vector<1x8x256xf32> to vector<8x256xf32>
    %49 = vector.broadcast %46 : vector<1x256xf32> to vector<8x256xf32>
    %50 = arith.mulf %49, %48 : vector<8x256xf32>
    %51 = arith.addf %45, %50 : vector<8x256xf32>
    %52 = vector.extract_strided_slice %44 {offsets = [1, 0], sizes = [1, 256], strides = [1, 1]} : vector<4x256xf32> to vector<1x256xf32>
    %c1_26 = arith.constant 1 : index
    %c0_27 = arith.constant 0 : index
    %c0_28 = arith.constant 0 : index
    %53 = vector.load %arg3[%c1_26, %c0_27, %c0_28] : memref<4x8x256xf32, #tpu.memory_space<vmem>>, vector<1x8x256xf32>
    %54 = vector.shape_cast %53 : vector<1x8x256xf32> to vector<8x256xf32>
    %55 = vector.broadcast %52 : vector<1x256xf32> to vector<8x256xf32>
    %56 = arith.mulf %55, %54 : vector<8x256xf32>
    %57 = arith.addf %51, %56 : vector<8x256xf32>
    %58 = vector.extract_strided_slice %44 {offsets = [2, 0], sizes = [1, 256], strides = [1, 1]} : vector<4x256xf32> to vector<1x256xf32>
    %c2_29 = arith.constant 2 : index
    %c0_30 = arith.constant 0 : index
    %c0_31 = arith.constant 0 : index
    %59 = vector.load %arg3[%c2_29, %c0_30, %c0_31] : memref<4x8x256xf32, #tpu.memory_space<vmem>>, vector<1x8x256xf32>
    %60 = vector.shape_cast %59 : vector<1x8x256xf32> to vector<8x256xf32>
    %61 = vector.broadcast %58 : vector<1x256xf32> to vector<8x256xf32>
    %62 = arith.mulf %61, %60 : vector<8x256xf32>
    %63 = arith.addf %57, %62 : vector<8x256xf32>
    %64 = vector.extract_strided_slice %44 {offsets = [3, 0], sizes = [1, 256], strides = [1, 1]} : vector<4x256xf32> to vector<1x256xf32>
    %c3_32 = arith.constant 3 : index
    %c0_33 = arith.constant 0 : index
    %c0_34 = arith.constant 0 : index
    %65 = vector.load %arg3[%c3_32, %c0_33, %c0_34] : memref<4x8x256xf32, #tpu.memory_space<vmem>>, vector<1x8x256xf32>
    %66 = vector.shape_cast %65 : vector<1x8x256xf32> to vector<8x256xf32>
    %67 = vector.broadcast %64 : vector<1x256xf32> to vector<8x256xf32>
    %68 = arith.mulf %67, %66 : vector<8x256xf32>
    %69 = arith.addf %63, %68 : vector<8x256xf32>
    %cst = arith.constant 0.000000e+00 : f32
    %70 = vector.broadcast %cst : f32 to vector<8x256xf32>
    %71 = arith.subf %70, %69 : vector<8x256xf32>
    %72 = math.exp %71 : vector<8x256xf32>
    %cst_35 = arith.constant 1.000000e+00 : f32
    %73 = vector.broadcast %cst_35 : f32 to vector<8x256xf32>
    %74 = arith.addf %73, %72 : vector<8x256xf32>
    %75 = tpu.reciprocal %74 : vector<8x256xf32> -> vector<8x256xf32>
    %76 = arith.mulf %69, %75 : vector<8x256xf32>
    %c0_36 = arith.constant 0 : index
    %c0_37 = arith.constant 0 : index
    %c0_38 = arith.constant 0 : index
    %77 = vector.load %arg5[%c0_36, %c0_37, %c0_38] : memref<1x8x256xf32, #tpu.memory_space<vmem>>, vector<1x8x256xf32>
    %78 = vector.shape_cast %77 : vector<1x8x256xf32> to vector<8x256xf32>
    %79 = vector.shape_cast %76 : vector<8x256xf32> to vector<1x8x256xf32>
    tpu.vector_store %arg5[%c0_36, %c0_37, %c0_38], %79 {strides = array<i32>} : memref<1x8x256xf32, #tpu.memory_space<vmem>>, vector<1x8x256xf32>,
    return
  }
  func.func @transform_0(%arg0: i32) -> (i32, i32, i32) {
    %c0_i32 = arith.constant 0 : i32
    %c0_i32_0 = arith.constant 0 : i32
    %c0_i32_1 = arith.constant 0 : i32
    return %arg0, %c0_i32, %c0_i32_0 : i32, i32, i32
  }
  func.func @transform_1(%arg0: i32) -> (i32, i32, i32) {
    %c0_i32 = arith.constant 0 : i32
    %c0_i32_0 = arith.constant 0 : i32
    %c0_i32_1 = arith.constant 0 : i32
    %c0_i32_2 = arith.constant 0 : i32
    return %c0_i32, %c0_i32_0, %c0_i32_1 : i32, i32, i32
  }
  func.func @transform_2(%arg0: i32) -> (i32, i32, i32) {
    %c0_i32 = arith.constant 0 : i32
    %c0_i32_0 = arith.constant 0 : i32
    %c0_i32_1 = arith.constant 0 : i32
    %c0_i32_2 = arith.constant 0 : i32
    return %c0_i32, %c0_i32_0, %c0_i32_1 : i32, i32, i32
  }
  func.func @transform_3(%arg0: i32) -> (i32, i32) {
    %c0_i32 = arith.constant 0 : i32
    %c0_i32_0 = arith.constant 0 : i32
    %c0_i32_1 = arith.constant 0 : i32
    return %c0_i32, %c0_i32_0 : i32, i32
  }
  func.func @transform_4(%arg0: i32) -> (i32, i32, i32) {
    %c0_i32 = arith.constant 0 : i32
    %c0_i32_0 = arith.constant 0 : i32
    %c0_i32_1 = arith.constant 0 : i32
    return %arg0, %c0_i32, %c0_i32_0 : i32, i32, i32
  }
}

</mosaic_0001>

<llo_original>
// kernel: tpu_custom_call.1
$region0: #{tpu_custom_call.1}
  #allocation0 [shape = 'u32[]', space=smem, size = 0x4, offset = 0x4, fixed_abs, tag = 'smem constant byte address 0x4 - core index']
  #allocation1 [shape = 'u32[144,128]{1,0:T(1,128)}', space=vmem, size = 0x12000, scoped, tag = 'internal scratch']
  %s0 = inlined_call_operand.hbm [shape: f32[2,4,256], index: 0, kind: input, shape index: {}]
  %s1 = inlined_call_operand.hbm [shape: f32[9,4,256], index: 1, kind: input, shape index: {}]
  %s2 = inlined_call_operand.hbm [shape: f32[4,8,256], index: 2, kind: input, shape index: {}]
  %s3 = inlined_call_operand.hbm [shape: f32[8,256], index: 3, kind: input, shape index: {}]
  %s4 = inlined_call_operand.hbm [shape: f32[2,8,256], index: 4, kind: output, shape index: {}]
  %s5 = sld [smem:[#allocation0]]
  $region65: #{tpu_custom_call.1} parent=0
    _
  %s7 = ssub.s32 1, %s5
  %s8 = scalar_select 0, %s7, %s5
  $region1: #{tpu_custom_call.1} parent=0
    #allocation2 [shape = 'u8[8192]{0}', space=vmem, size = 0x2000, scoped, tag = 'input window, operand 0']
    #allocation3 [shape = 's32[2]{0}', space=sflag, size = 0x8, scoped, tag = 'scoped memory for tpu_custom_call.1']
    #allocation4 [shape = 's32[2]{0}', space=sflag, size = 0x8, scoped, tag = 'scoped memory for tpu_custom_call.1']
    #allocation5 [shape = 'u8[36864]{0}', space=vmem, size = 0x9000, scoped, tag = 'input window, operand 1, single buffered']
    #allocation6 [shape = 's32[1]{0}', space=sflag, size = 0x4, scoped, tag = 'scoped memory for tpu_custom_call.1']
    #allocation7 [shape = 'u8[32768]{0}', space=vmem, size = 0x8000, scoped, tag = 'input window, operand 2, single buffered']
    #allocation8 [shape = 'u8[8192]{0}', space=vmem, size = 0x2000, scoped, tag = 'input window, operand 3, single buffered']
    #allocation9 [shape = 's32[1]{0}', space=sflag, size = 0x4, scoped, tag = 'scoped memory for tpu_custom_call.1']
    #allocation10 [shape = 'u8[16384]{0}', space=vmem, size = 0x4000, scoped, tag = 'output window, operand 0']
    %9 = vsyncpa [#allocation3], 0
    %s10 = scalar_lea.sflag [#allocation3], 1
    %11 = vsyncpa %s10, 0
    %12 = vsyncpa [#allocation6], 0
    %13 = vsyncpa [#allocation9], 0
    %14 = vsyncpa [#allocation4], 0
    %s15 = scalar_lea.sflag [#allocation4], 1
    %16 = vsyncpa %s15, 0
    loop: start=0, step=1, limit=4
    $region2: #{tpu_custom_call.1} parent=1 // loop_pre_header
      _
    $region3: #{tpu_custom_call.1} parent=1 // loop_header
      %s18 = sphi 0, %s22
      %p19 = scmp.ge.s32.totalorder %s18, 4
      %s28 = sphi 0, %s30
      %s31 = sphi 0, %s28
      %s32 = sphi 0, %s31
      %s48 = sphi 0, %s32
      %s52 = sphi 0, %s52
      %s54 = sphi 0, %s52
      %s55 = sphi 0, %s54
      %s69 = sphi 0, %s55
      %s73 = sphi 0, %s73
      %s75 = sphi 0, %s73
      %s76 = sphi 0, %s75
      %s90 = sphi 0, %s76
      %s94 = sphi 0, %s94
      %s96 = sphi 0, %s94
      %s97 = sphi 0, %s96
      %s111 = sphi 0, %s97
      %s117 = sphi 0, %s119
      %s120 = sphi 0, %s117
      %s121 = sphi 0, %s120
      %s137 = sphi 0, %s121
    $region4: #{tpu_custom_call.1} parent=1 // loop_header_branch
      %21 = sbr.rel (%p19) target = $region8
    $region5: #{tpu_custom_call.1} parent=1 // loop_body
      %s23 = ssub.s32 %s18, 1
      %s24 = ssub.s32 %s18, 2
      %s25 = sadd.s32 %s18, 1
      %s26 = ssub.s32 %s18, %s25
      %p27 = scmp.eq.s32.totalorder %s26, 0
      %s29 = sadd.s32 %s28, 1
      %s30 = scalar_select %p27, %s28, %s29
      %p33 = pneg %p27
      %p34 = scmp.eq.s32.totalorder %s18, 1
      %p35 = por %p33, %p34
      %p36 = scmp.ne.s32.totalorder %s28, %s31
      %p37 = scmp.eq.s32.totalorder %s18, 0
      %p38 = por %p36, %p37
      %p39 = scmp.ne.s32.totalorder %s28, %s31
      %p40 = scmp.eq.s32.totalorder %s23, 1
      %p41 = por %p39, %p40
      %p42 = scmp.ne.s32.totalorder %s31, %s32
      %p43 = scmp.eq.s32.totalorder %s23, 0
      %p44 = por %p42, %p43
      %p45 = scmp.ne.s32.totalorder %s31, %s32
      %p46 = scmp.eq.s32.totalorder %s24, 1
      %p47 = por %p45, %p46
      %p49 = scmp.ne.s32.totalorder %s32, %s48
      %p50 = scmp.eq.s32.totalorder %s24, 0
      %p51 = por %p49, %p50
      %s53 = sadd.s32 %s52, 1
      %p56 = scmp.eq.s32.totalorder %s18, 1
      %p57 = scmp.ne.s32.totalorder %s52, %s54
      %p58 = scmp.eq.s32.totalorder %s18, 0
      %p59 = por %p57, %p58
      %p60 = scmp.ne.s32.totalorder %s52, %s54
      %p61 = scmp.eq.s32.totalorder %s23, 1
      %p62 = por %p60, %p61
      %p63 = scmp.ne.s32.totalorder %s54, %s55
      %p64 = scmp.eq.s32.totalorder %s23, 0
      %p65 = por %p63, %p64
      %p66 = scmp.ne.s32.totalorder %s54, %s55
      %p67 = scmp.eq.s32.totalorder %s24, 1
      %p68 = por %p66, %p67
      %p70 = scmp.ne.s32.totalorder %s55, %s69
      %p71 = scmp.eq.s32.totalorder %s24, 0
      %p72 = por %p70, %p71
      %s74 = sadd.s32 %s73, 1
      %p77 = scmp.eq.s32.totalorder %s18, 1
      %p78 = scmp.ne.s32.totalorder %s73, %s75
      %p79 = scmp.eq.s32.totalorder %s18, 0
      %p80 = por %p78, %p79
      %p81 = scmp.ne.s32.totalorder %s73, %s75
      %p82 = scmp.eq.s32.totalorder %s23, 1
      %p83 = por %p81, %p82
      %p84 = scmp.ne.s32.totalorder %s75, %s76
      %p85 = scmp.eq.s32.totalorder %s23, 0
      %p86 = por %p84, %p85
      %p87 = scmp.ne.s32.totalorder %s75, %s76
      %p88 = scmp.eq.s32.totalorder %s24, 1
      %p89 = por %p87, %p88
      %p91 = scmp.ne.s32.totalorder %s76, %s90
      %p92 = scmp.eq.s32.totalorder %s24, 0
      %p93 = por %p91, %p92
      %s95 = sadd.s32 %s94, 1
      %p98 = scmp.eq.s32.totalorder %s18, 1
      %p99 = scmp.ne.s32.totalorder %s94, %s96
      %p100 = scmp.eq.s32.totalorder %s18, 0
      %p101 = por %p99, %p100
      %p102 = scmp.ne.s32.totalorder %s94, %s96
      %p103 = scmp.eq.s32.totalorder %s23, 1
      %p104 = por %p102, %p103
      %p105 = scmp.ne.s32.totalorder %s96, %s97
      %p106 = scmp.eq.s32.totalorder %s23, 0
      %p107 = por %p105, %p106
      %p108 = scmp.ne.s32.totalorder %s96, %s97
      %p109 = scmp.eq.s32.totalorder %s24, 1
      %p110 = por %p108, %p109
      %p112 = scmp.ne.s32.totalorder %s97, %s111
      %p113 = scmp.eq.s32.totalorder %s24, 0
      %p114 = por %p112, %p113
      %s115 = ssub.s32 %s18, %s25
      %p116 = scmp.eq.s32.totalorder %s115, 0
      %s118 = sadd.s32 %s117, 1
      %s119 = scalar_select %p116, %s117, %s118
      %p122 = pneg %p116
      %p123 = scmp.eq.s32.totalorder %s18, 1
      %p124 = por %p122, %p123
      %p125 = scmp.ne.s32.totalorder %s117, %s120
      %p126 = scmp.eq.s32.totalorder %s18, 0
      %p127 = por %p125, %p126
      %p128 = scmp.ne.s32.totalorder %s117, %s120
      %p129 = scmp.eq.s32.totalorder %s23, 1
      %p130 = por %p128, %p129
      %p131 = scmp.ne.s32.totalorder %s120, %s121
      %p132 = scmp.eq.s32.totalorder %s23, 0
      %p133 = por %p131, %p132
      %p134 = scmp.ne.s32.totalorder %s120, %s121
      %p135 = scmp.eq.s32.totalorder %s24, 1
      %p136 = por %p134, %p135
      %p138 = scmp.ne.s32.totalorder %s121, %s137
      %p139 = scmp.eq.s32.totalorder %s24, 0
      %p140 = por %p138, %p139
      %p141 = scmp.le.s32.totalorder 1, %s18
      %p142 = scmp.lt.s32.totalorder %s18, 3
      %p143 = pnand %p141, %p142
      %p144 = pneg %p143
      // Predicated region
      $region9: #{tpu_custom_call.1} parent=5 // pred_check
        _
      $region10: #{tpu_custom_call.1} parent=5 // pred_check_branch
        %146 = sbr.rel (%p143) target = $region12
      $region11: #{tpu_custom_call.1} parent=5 // pred_region
        %s147 = ssub.s32 %s18, 1
        // Predicated region
        $region13: #{tpu_custom_call.1} parent=11 // pred_check
          %p148 = pneg %p65
        $region14: #{tpu_custom_call.1} parent=11 // pred_check_branch
          %150 = sbr.rel (%p148) target = $region16
        $region15: #{tpu_custom_call.1} parent=11 // pred_region
          %s152 = ssub.s32 1152, 1152
          %153 = vsyncadd [#allocation6], %s152
          %s154 = sshll.u32 [#allocation5], 4
          %s155 = int_to_ptr.vmem [resolvable:$true] %s154
          %160 = dma.hbm_to_vmem [thread:$0]  %s1, 1152, %s155, [#allocation6], 128, 128, 8
        $region16: #{tpu_custom_call.1} parent=11 // pred_fallthru
          _
        // Predicated region
        $region17: #{tpu_custom_call.1} parent=11 // pred_check
          %p161 = pneg %p86
        $region18: #{tpu_custom_call.1} parent=11 // pred_check_branch
          %163 = sbr.rel (%p161) target = $region20
        $region19: #{tpu_custom_call.1} parent=11 // pred_region
          %s165 = ssub.s32 1024, 1024
          %166 = vsyncadd [#allocation6], %s165
          %s167 = sshll.u32 [#allocation7], 4
          %s168 = int_to_ptr.vmem [resolvable:$true] %s167
          %173 = dma.hbm_to_vmem [thread:$0]  %s2, 1024, %s168, [#allocation6], 256, 256, 16
        $region20: #{tpu_custom_call.1} parent=11 // pred_fallthru
          _
        // Predicated region
        $region21: #{tpu_custom_call.1} parent=11 // pred_check
          %p174 = pneg %p107
        $region22: #{tpu_custom_call.1} parent=11 // pred_check_branch
          %176 = sbr.rel (%p174) target = $region24
        $region23: #{tpu_custom_call.1} parent=11 // pred_region
          %s178 = ssub.s32 256, 256
          %179 = vsyncadd [#allocation9], %s178
          %s181 = sshll.u32 [#allocation8], 4
          %s182 = int_to_ptr.vmem [resolvable:$true] %s181
          %184 = dma.hbm_to_vmem [thread:$0]  %s3, 256, %s182, [#allocation9]
        $region24: #{tpu_custom_call.1} parent=11 // pred_fallthru
          _
      $region12: #{tpu_custom_call.1} parent=5 // pred_fallthru
        _
      %p185 = scmp.lt.s32.totalorder %s18, 2
      // Predicated region
      $region25: #{tpu_custom_call.1} parent=5 // pred_check
        %p186 = pneg %p185
      $region26: #{tpu_custom_call.1} parent=5 // pred_check_branch
        %188 = sbr.rel (%p186) target = $region28
      $region27: #{tpu_custom_call.1} parent=5 // pred_region
        // Predicated region
        $region29: #{tpu_custom_call.1} parent=27 // pred_check
          %p189 = pneg %p38
        $region30: #{tpu_custom_call.1} parent=27 // pred_check_branch
          %191 = sbr.rel (%p189) target = $region32
        $region31: #{tpu_custom_call.1} parent=27 // pred_region
          %s192 = sand.u32 %s28, 1
          %s193 = scalar_lea.sflag [#allocation3], %s192
          %s194 = sand.u32 %s28, 1
          %s195 = smul.addr %s194, 8
          %s196 = scalar_lea.vmem [#allocation2], %s195
          %s198 = ssub.s32 128, 128
          %199 = vsyncadd %s193, %s198
          %s200 = smul.addr %s18, 2
          %s201 = smul.addr %s200, 64
          %s202 = scalar_lea.hbm %s0, %s201
          %s204 = sshll.u32 %s196, 4
          %s205 = int_to_ptr.vmem [resolvable:$true] %s204
          %207 = dma.hbm_to_vmem [thread:$0]  %s202, 128, %s205, %s193
        $region32: #{tpu_custom_call.1} parent=27 // pred_fallthru
          _
      $region28: #{tpu_custom_call.1} parent=5 // pred_fallthru
        _
      %p208 = scmp.le.s32.totalorder 1, %s18
      %p209 = scmp.lt.s32.totalorder %s18, 3
      %p210 = pnand %p208, %p209
      %p211 = pneg %p210
      // Predicated region
      $region33: #{tpu_custom_call.1} parent=5 // pred_check
        _
      $region34: #{tpu_custom_call.1} parent=5 // pred_check_branch
        %213 = sbr.rel (%p210) target = $region36
      $region35: #{tpu_custom_call.1} parent=5 // pred_region
        %s214 = ssub.s32 %s18, 1
        %s215 = sand.u32 %s31, 1
        %s216 = scalar_lea.sflag [#allocation3], %s215
        %s217 = sand.u32 %s31, 1
        %s218 = smul.addr %s217, 8
        %s219 = scalar_lea.vmem [#allocation2], %s218
        // Predicated region
        $region37: #{tpu_custom_call.1} parent=35 // pred_check
          %p220 = pneg %p44
        $region38: #{tpu_custom_call.1} parent=35 // pred_check_branch
          %222 = sbr.rel (%p220) target = $region40
        $region39: #{tpu_custom_call.1} parent=35 // pred_region
          %223 = dma.done %s216, 128
        $region40: #{tpu_custom_call.1} parent=35 // pred_fallthru
          _
        // Predicated region
        $region41: #{tpu_custom_call.1} parent=35 // pred_check
          %p224 = pneg %p65
        $region42: #{tpu_custom_call.1} parent=35 // pred_check_branch
          %226 = sbr.rel (%p224) target = $region44
        $region43: #{tpu_custom_call.1} parent=35 // pred_region
          %227 = dma.done [#allocation6], 1152
        $region44: #{tpu_custom_call.1} parent=35 // pred_fallthru
          _
        // Predicated region
        $region45: #{tpu_custom_call.1} parent=35 // pred_check
          %p228 = pneg %p86
        $region46: #{tpu_custom_call.1} parent=35 // pred_check_branch
          %230 = sbr.rel (%p228) target = $region48
        $region47: #{tpu_custom_call.1} parent=35 // pred_region
          %231 = dma.done [#allocation6], 1024
        $region48: #{tpu_custom_call.1} parent=35 // pred_fallthru
          _
        // Predicated region
        $region49: #{tpu_custom_call.1} parent=35 // pred_check
          %p232 = pneg %p107
        $region50: #{tpu_custom_call.1} parent=35 // pred_check_branch
          %234 = sbr.rel (%p232) target = $region52
        $region51: #{tpu_custom_call.1} parent=35 // pred_region
          %235 = dma.done [#allocation9], 256
        $region52: #{tpu_custom_call.1} parent=35 // pred_fallthru
          _
        %s236 = sand.u32 %s31, 1
        %s237 = scalar_lea.sflag [#allocation3], %s236
        %s238 = sand.u32 %s31, 1
        %s239 = smul.addr %s238, 8
        %s240 = scalar_lea.vmem [#allocation2], %s239
        %p241 = pneg %p44
        %p242 = pneg %p41
        %p243 = pneg %p65
        %p244 = pneg %p62
        %p245 = pneg %p86
        %p246 = pneg %p83
        %p247 = pneg %p107
        %p248 = pneg %p104
        %p249 = pneg %p133
        %p250 = pneg %p130
        %s251 = sand.u32 %s120, 1
        %s252 = scalar_lea.sflag [#allocation4], %s251
        %s253 = sand.u32 %s120, 1
        %s254 = smul.addr %s253, 16
        %s255 = scalar_lea.vmem [#allocation10], %s254
        %v256 = vld [vmem:[%s219] sm:$0xff]
        %s257 = scalar_lea.vmem [#allocation5], 32
        %v258 = vld [vmem:[%s257] sm:$0xff]
        %v259 = vmul.f32 %v256, %v258
        %v261 = vcombine.high %v256, %v256
        %263 = vrot.lane.b32.xlu0 %v256, 17
        %v264 = vpop.permute.xlu0 %263
        %265 = vrot.lane.b32.xlu0 %v261, 17
        %v266 = vpop.permute.xlu0 %265
        %v267 = vlaneseq
        %v268 = vand.u32 %v267, 127
        %vm269 = vcmp.lt.s32.totalorder %v268, 17
        %v270 = vsel %vm269, %v264, %v266
        %v271 = vsel %vm269, %v266, %v264
        %v272 = vld [vmem:[#allocation5] sm:$0xff]
        %v274 = vcombine.high %v272, %v272
        %v276 = vmul.f32 %v271, %v272
        %v277 = vmul.f32 %v270, %v274
        %v280 = vcombine.low %v276, %v277
        %v282 = vadd.f32 %v259, %v280
        %283 = vrot.lane.b32.xlu0 %v256, 16
        %v284 = vpop.permute.xlu0 %283
        %285 = vrot.lane.b32.xlu0 %v261, 16
        %v286 = vpop.permute.xlu0 %285
        %vm287 = vcmp.lt.s32.totalorder %v268, 16
        %v288 = vsel %vm287, %v284, %v286
        %v289 = vsel %vm287, %v286, %v284
        %s290 = scalar_lea.vmem [#allocation5], 8
        %v291 = vld [vmem:[%s290] sm:$0xff]
        %v293 = vcombine.high %v291, %v291
        %v295 = vmul.f32 %v289, %v291
        %v296 = vmul.f32 %v288, %v293
        %v299 = vcombine.low %v295, %v296
        %v301 = vadd.f32 %v282, %v299
        %302 = vrot.lane.b32.xlu0 %v256, 15
        %v303 = vpop.permute.xlu0 %302
        %304 = vrot.lane.b32.xlu0 %v261, 15
        %v305 = vpop.permute.xlu0 %304
        %vm306 = vcmp.lt.s32.totalorder %v268, 15
        %v307 = vsel %vm306, %v303, %v305
        %v308 = vsel %vm306, %v305, %v303
        %s309 = scalar_lea.vmem [#allocation5], 16
        %v310 = vld [vmem:[%s309] sm:$0xff]
        %v312 = vcombine.high %v310, %v310
        %v314 = vmul.f32 %v308, %v310
        %v315 = vmul.f32 %v307, %v312
        %v318 = vcombine.low %v314, %v315
        %v320 = vadd.f32 %v301, %v318
        %321 = vrot.lane.b32.xlu0 %v256, 1
        %v322 = vpop.permute.xlu0 %321
        %323 = vrot.lane.b32.xlu0 %v261, 1
        %v324 = vpop.permute.xlu0 %323
        %vm325 = vcmp.lt.s32.totalorder %v268, 1
        %v326 = vsel %vm325, %v322, %v324
        %v327 = vsel %vm325, %v324, %v322
        %s328 = scalar_lea.vmem [#allocation5], 24
        %v329 = vld [vmem:[%s328] sm:$0xff]
        %v331 = vcombine.high %v329, %v329
        %v333 = vmul.f32 %v327, %v329
        %v334 = vmul.f32 %v326, %v331
        %v337 = vcombine.low %v333, %v334
        %v339 = vadd.f32 %v320, %v337
        %340 = vrot.lane.b32.xlu0 %v256, 127
        %v341 = vpop.permute.xlu0 %340
        %342 = vrot.lane.b32.xlu0 %v261, 127
        %v343 = vpop.permute.xlu0 %342
        %vm344 = vcmp.lt.s32.totalorder %v268, 127
        %v345 = vsel %vm344, %v341, %v343
        %v346 = vsel %vm344, %v343, %v341
        %s347 = scalar_lea.vmem [#allocation5], 40
        %v348 = vld [vmem:[%s347] sm:$0xff]
        %v350 = vcombine.high %v348, %v348
        %v352 = vmul.f32 %v345, %v348
        %v353 = vmul.f32 %v346, %v350
        %v356 = vcombine.low %v352, %v353
        %v358 = vadd.f32 %v339, %v356
        %359 = vrot.lane.b32.xlu0 %v256, 113
        %v360 = vpop.permute.xlu0 %359
        %361 = vrot.lane.b32.xlu0 %v261, 113
        %v362 = vpop.permute.xlu0 %361
        %vm363 = vcmp.lt.s32.totalorder %v268, 113
        %v364 = vsel %vm363, %v360, %v362
        %v365 = vsel %vm363, %v362, %v360
        %s366 = scalar_lea.vmem [#allocation5], 48
        %v367 = vld [vmem:[%s366] sm:$0xff]
        %v369 = vcombine.high %v367, %v367
        %v371 = vmul.f32 %v364, %v367
        %v372 = vmul.f32 %v365, %v369
        %v375 = vcombine.low %v371, %v372
        %v377 = vadd.f32 %v358, %v375
        %378 = vrot.lane.b32.xlu0 %v256, 112
        %v379 = vpop.permute.xlu0 %378
        %380 = vrot.lane.b32.xlu0 %v261, 112
        %v381 = vpop.permute.xlu0 %380
        %vm382 = vcmp.lt.s32.totalorder %v268, 112
        %v383 = vsel %vm382, %v379, %v381
        %v384 = vsel %vm382, %v381, %v379
        %s385 = scalar_lea.vmem [#allocation5], 56
        %v386 = vld [vmem:[%s385] sm:$0xff]
        %v388 = vcombine.high %v386, %v386
        %v390 = vmul.f32 %v383, %v386
        %v391 = vmul.f32 %v384, %v388
        %v394 = vcombine.low %v390, %v391
        %v396 = vadd.f32 %v377, %v394
        %397 = vrot.lane.b32.xlu0 %v256, 111
        %v398 = vpop.permute.xlu0 %397
        %399 = vrot.lane.b32.xlu0 %v261, 111
        %v400 = vpop.permute.xlu0 %399
        %vm401 = vcmp.lt.s32.totalorder %v268, 111
        %v402 = vsel %vm401, %v398, %v400
        %v403 = vsel %vm401, %v400, %v398
        %s404 = scalar_lea.vmem [#allocation5], 64
        %v405 = vld [vmem:[%s404] sm:$0xff]
        %v407 = vcombine.high %v405, %v405
        %v409 = vmul.f32 %v402, %v405
        %v410 = vmul.f32 %v403, %v407
        %v413 = vcombine.low %v409, %v410
        %v415 = vadd.f32 %v396, %v413
        %v416 = vld [vmem:[#allocation8] sm:$0xff]
        %v417 = vld [vmem:[#allocation8 + $0x8] sm:$0xff]
        %v418 = vld [vmem:[#allocation7] sm:$0xff]
        %v419 = vld [vmem:[#allocation7 + $0x8] sm:$0xff]
        %v421 = vlaneseq
        %v422 = vshrl.u32 %v421, 7
        %v423 = vsub.s32 0, %v422
        %v424 = vrot.slane %v415, %v423
        %v425 = vlaneseq
        %v426 = vshrl.u32 %v425, 7
        %v427 = vsub.s32 4, %v426
        %v428 = vrot.slane %v415, %v427
        %v431 = vlaneseq
        %v432 = vshrl.u32 %v431, 7
        %v433 = vsub.s32 0, %v432
        %v434 = vrot.slane %v424, %v433
        %v435 = vlaneseq
        %v436 = vshrl.u32 %v435, 7
        %v437 = vsub.s32 0, %v436
        %v438 = vrot.slane %v428, %v437
        %v439 = vmul.f32 %v434, %v418
        %v440 = vmul.f32 %v438, %v419
        %v441 = vadd.f32 %v416, %v439
        %v442 = vadd.f32 %v417, %v440
        %s443 = scalar_lea.vmem [#allocation7], 16
        %v444 = vld [vmem:[%s443] sm:$0xff]
        %v445 = vld [vmem:[%s443 + $0x8] sm:$0xff]
        %v446 = vlaneseq
        %v447 = vshrl.u32 %v446, 7
        %v448 = vsub.s32 1, %v447
        %v449 = vrot.slane %v415, %v448
        %v450 = vlaneseq
        %v451 = vshrl.u32 %v450, 7
        %v452 = vsub.s32 5, %v451
        %v453 = vrot.slane %v415, %v452
        %v456 = vlaneseq
        %v457 = vshrl.u32 %v456, 7
        %v458 = vsub.s32 1, %v457
        %v459 = vrot.slane %v449, %v458
        %v460 = vlaneseq
        %v461 = vshrl.u32 %v460, 7
        %v462 = vsub.s32 1, %v461
        %v463 = vrot.slane %v453, %v462
        %v464 = vmul.f32 %v459, %v444
        %v465 = vmul.f32 %v463, %v445
        %v466 = vadd.f32 %v441, %v464
        %v467 = vadd.f32 %v442, %v465
        %s468 = scalar_lea.vmem [#allocation7], 32
        %v469 = vld [vmem:[%s468] sm:$0xff]
        %v470 = vld [vmem:[%s468 + $0x8] sm:$0xff]
        %v471 = vlaneseq
        %v472 = vshrl.u32 %v471, 7
        %v473 = vsub.s32 2, %v472
        %v474 = vrot.slane %v415, %v473
        %v475 = vlaneseq
        %v476 = vshrl.u32 %v475, 7
        %v477 = vsub.s32 6, %v476
        %v478 = vrot.slane %v415, %v477
        %v481 = vlaneseq
        %v482 = vshrl.u32 %v481, 7
        %v483 = vsub.s32 2, %v482
        %v484 = vrot.slane %v474, %v483
        %v485 = vlaneseq
        %v486 = vshrl.u32 %v485, 7
        %v487 = vsub.s32 2, %v486
        %v488 = vrot.slane %v478, %v487
        %v489 = vmul.f32 %v484, %v469
        %v490 = vmul.f32 %v488, %v470
        %v491 = vadd.f32 %v466, %v489
        %v492 = vadd.f32 %v467, %v490
        %s493 = scalar_lea.vmem [#allocation7], 48
        %v494 = vld [vmem:[%s493] sm:$0xff]
        %v495 = vld [vmem:[%s493 + $0x8] sm:$0xff]
        %v496 = vlaneseq
        %v497 = vshrl.u32 %v496, 7
        %v498 = vsub.s32 3, %v497
        %v499 = vrot.slane %v415, %v498
        %v500 = vlaneseq
        %v501 = vshrl.u32 %v500, 7
        %v502 = vsub.s32 7, %v501
        %v503 = vrot.slane %v415, %v502
        %v506 = vlaneseq
        %v507 = vshrl.u32 %v506, 7
        %v508 = vsub.s32 3, %v507
        %v509 = vrot.slane %v499, %v508
        %v510 = vlaneseq
        %v511 = vshrl.u32 %v510, 7
        %v512 = vsub.s32 3, %v511
        %v513 = vrot.slane %v503, %v512
        %v514 = vmul.f32 %v509, %v494
        %v515 = vmul.f32 %v513, %v495
        %v516 = vadd.f32 %v491, %v514
        %v517 = vadd.f32 %v492, %v515
        %v518 = vsub.f32 0.0, %v516
        %v519 = vsub.f32 0.0, %v517
        %v520 = vmul.f32 %v518, 1.442695
        %v521 = vpow.pop %v520
        %v522 = vmul.f32 %v519, 1.442695
        %v523 = vpow.pop %v522
        %v524 = vadd.f32 %v521, 1.0
        %v525 = vadd.f32 %v523, 1.0
        %v526 = vrcp.pop %v524
        %v527 = vrcp.pop %v525
        %v528 = vmul.f32 %v516, %v526
        %v529 = vmul.f32 %v517, %v527
        %530 = vst [vmem:[%s255] sm:$0xff] %v528
        %531 = vst [vmem:[%s255 + $0x8] sm:$0xff] %v529
        %s532 = sand.u32 %s120, 1
        %s533 = scalar_lea.sflag [#allocation4], %s532
        %s534 = sand.u32 %s120, 1
        %s535 = smul.addr %s534, 16
        %s536 = scalar_lea.vmem [#allocation10], %s535
        // Predicated region
        $region53: #{tpu_custom_call.1} parent=35 // pred_check
          %p537 = pneg %p130
        $region54: #{tpu_custom_call.1} parent=35 // pred_check_branch
          %539 = sbr.rel (%p537) target = $region56
        $region55: #{tpu_custom_call.1} parent=35 // pred_region
          %s541 = ssub.s32 256, 256
          %542 = vsyncadd %s533, %s541
          %s543 = smul.addr %s23, 2
          %s544 = smul.addr %s543, 128
          %s545 = scalar_lea.hbm %s4, %s544
          %s547 = sshll.u32 %s536, 4
          %s548 = int_to_ptr.vmem [resolvable:$true] %s547
          %550 = dma.vmem_to_hbm [thread:$0]  %s548, 256, %s545, %s533
        $region56: #{tpu_custom_call.1} parent=35 // pred_fallthru
          _
      $region36: #{tpu_custom_call.1} parent=5 // pred_fallthru
        _
      %p551 = scmp.le.s32.totalorder 2, %s18
      // Predicated region
      $region57: #{tpu_custom_call.1} parent=5 // pred_check
        %p552 = pneg %p551
      $region58: #{tpu_custom_call.1} parent=5 // pred_check_branch
        %554 = sbr.rel (%p552) target = $region60
      $region59: #{tpu_custom_call.1} parent=5 // pred_region
        %s555 = ssub.s32 %s18, 2
        // Predicated region
        $region61: #{tpu_custom_call.1} parent=59 // pred_check
          %p556 = pneg %p136
        $region62: #{tpu_custom_call.1} parent=59 // pred_check_branch
          %558 = sbr.rel (%p556) target = $region64
        $region63: #{tpu_custom_call.1} parent=59 // pred_region
          %s559 = sand.u32 %s121, 1
          %s560 = scalar_lea.sflag [#allocation4], %s559
          %s561 = sand.u32 %s121, 1
          %s562 = smul.addr %s561, 16
          %s563 = scalar_lea.vmem [#allocation10], %s562
          %564 = dma.done %s560, 256
        $region64: #{tpu_custom_call.1} parent=59 // pred_fallthru
          _
      $region60: #{tpu_custom_call.1} parent=5 // pred_fallthru
        _
    $region6: #{tpu_custom_call.1} parent=1 // loop_footer
      %s22 = sadd.s32 1, %s18
    $region7: #{tpu_custom_call.1} parent=1 // loop_footer_branch
      %17 = sbr.rel target = $region3
    $region8: #{tpu_custom_call.1} parent=1 // loop_exit
      _
    %565 = vsyncpa [#allocation3], 1
    %s566 = scalar_lea.sflag [#allocation3], 1
    %567 = vsyncpa %s566, 1
    %568 = vsyncpa [#allocation6], 1
    %569 = vsyncpa [#allocation9], 1
    %570 = vsyncpa [#allocation4], 1
    %s571 = scalar_lea.sflag [#allocation4], 1
    %572 = vsyncpa %s571, 1

</llo_original>
